<compile_context>
chip_gen: v5e
topology: v5e:2x2
jax: 0.10.0
libtpu: 0.0.40
codegen_flags: <defaults>
</compile_context>

<pallas_src>
import jax
import jax.numpy as jnp
from jax import lax
from jax.experimental import pallas as pl
from jax.experimental.pallas import tpu as pltpu

NUM_LAYERS = 4   # the "layers" that assign_devices would spread across devices
HIDDEN = 32
MAX_TM = 4096    # row-axis tile of the (m, hidden) activation slab

# 2-D dot_general dimension numbers (same idiom as the TPU attention kernels):
#   NT contracts the last dim of both operands, TN the first dim of both.
_NT = (((1,), (1,)), ((), ()))
_TN = (((0,), (0,)), ((), ()))


def _mlp_kernel(x_ref, w_ref, b_ref, w_last_ref, b_last_ref, out_ref):
    """Fused MLP forward on one (TM, HIDDEN) row tile of the activations.

    x_ref:      (TM, H)      activation tile, natural row-major layout
    w_ref:      (L-1, H, H)  layers 0..L-2 weights, PyTorch [out, in]
    b_ref:      (L-1, H, 1)  layers 0..L-2 biases as columns
    w_last_ref: (H, H)       last-layer weight pre-transposed to [in, out]
    b_last_ref: (1, H)       last-layer bias as a row
    out_ref:    (TM, H)

    Layers 0..L-2 run in the lane-dense (H, TM) orientation (M on lanes,
    hidden on sublanes); the transposes into and out of that orientation are
    folded into the first (NT) and last (TN) matmuls, so no separate
    transpose pass is needed on either side of the kernel.
    """
    # Layer 0:  (H_out, TM) = W0 @ x^T   (NT matmul folds the input transpose)
    h = lax.dot_general(w_ref[0], x_ref[...], _NT,
                        preferred_element_type=jnp.float32) + b_ref[0]
    h = jnp.maximum(h, 0.0)

    # Middle layers: standard W @ h in the lane-dense (H, TM) orientation.
    for i in range(1, NUM_LAYERS - 1):
        h = jnp.dot(w_ref[i], h, preferred_element_type=jnp.float32) + b_ref[i]
        h = jnp.maximum(h, 0.0)

    # Last layer: (TM, H_out) = h^T @ W_last^T  (TN matmul with the weight
    # stored as [in, out]; folds the output transpose).  No ReLU on the last
    # layer, matching the reference model.
    out = lax.dot_general(h, w_last_ref[...], _TN,
                          preferred_element_type=jnp.float32) + b_last_ref[...]
    out_ref[...] = out.astype(out_ref.dtype)


def _round_up(x, n):
    return ((x + n - 1) // n) * n


def _choose_tile(m_pad, max_tm=MAX_TM):
    """Largest multiple of 128 that divides m_pad and is <= max_tm.

    Using a dividing tile avoids padding the slab up to a multiple of TM
    (no extra HBM pass, no dead tail compute).  For m_pad > max_tm this
    automatically yields >= 2 grid steps (megacore-friendly on v7x).
    """
    k = m_pad // 128
    best = 1
    for g in range(1, min(k, max_tm // 128) + 1):
        if k % g == 0:
            best = g
    return 128 * best


def hybrid_model_forward(x, weights, biases):
    """Equivalent of HybridModel.forward(x=x) with the inner MLP model.

    x: [batch, seq, hidden] float32.
    weights: list of [hidden_out, hidden_in] arrays (PyTorch Linear layout).
    biases:  list of [hidden_out] arrays.
    """
    # TODO(synk): assign_devices / .to(device) has no TPU-kernel equivalent
    # (single-device execution); it is intentionally a no-op here.
    batch, seq, hidden = x.shape
    m = batch * seq

    # Natural row-major slab; pad rows only to the next multiple of 128
    # (at most 127 dead rows), then tile with a dividing TM.
    x2d = x.reshape(m, hidden)
    m_pad = _round_up(m, 128)
    if m_pad != m:
        x2d = jnp.pad(x2d, ((0, m_pad - m), (0, 0)))
    tm = _choose_tile(m_pad)
    grid = (m_pad // tm,)

    # Stacked, VMEM-resident parameters (constant index_maps); host-side
    # restacking/transposing touches only a few KiB.
    w_stack = jnp.stack(weights[:-1])                                  # (L-1,H,H) [out,in]
    b_stack = jnp.stack([b.reshape(hidden, 1) for b in biases[:-1]])   # (L-1,H,1)
    w_last_t = weights[-1].T                                           # (H,H) [in,out]
    b_last = biases[-1].reshape(1, hidden)                             # (1,H)

    out2d = pl.pallas_call(
        _mlp_kernel,
        out_shape=jax.ShapeDtypeStruct((m_pad, hidden), x.dtype),
        grid=grid,
        in_specs=[
            pl.BlockSpec((tm, hidden), lambda i: (i, 0)),
            pl.BlockSpec((NUM_LAYERS - 1, hidden, hidden), lambda i: (0, 0, 0)),
            pl.BlockSpec((NUM_LAYERS - 1, hidden, 1), lambda i: (0, 0, 0)),
            pl.BlockSpec((hidden, hidden), lambda i: (0, 0)),
            pl.BlockSpec((1, hidden), lambda i: (0, 0)),
        ],
        out_specs=pl.BlockSpec((tm, hidden), lambda i: (i, 0)),
        compiler_params=pltpu.CompilerParams(
            dimension_semantics=("parallel",),     # megacore sharding on v7x
            vmem_limit_bytes=48 * 1024 * 1024,     # within v7x 64 MiB physical
        ),
    )(x2d, w_stack, b_stack, w_last_t, b_last)

    # Un-pad rows and restore [batch, seq, hidden]; no transpose needed.
    return out2d[:m].reshape(batch, seq, hidden)


def _init_params(key):
    """Deterministic parameter init (nn.Linear layout: weight is [out, in])."""
    weights, biases = [], []
    for _ in range(NUM_LAYERS):
        kw, kb, key = jax.random.split(key, 3)
        w = (jax.random.normal(kw, (HIDDEN, HIDDEN), dtype=jnp.float32)
             * (1.0 / jnp.sqrt(HIDDEN)))
        b = jax.random.normal(kb, (HIDDEN,), dtype=jnp.float32) * 0.01
        weights.append(w)
        biases.append(b)
    return weights, biases, key


def _reference_forward(x, weights, biases):
    """Plain-JAX reference for correctness check."""
    b_, s_, h_ = x.shape
    h = x.reshape(b_ * s_, h_)
    for i, (w, b) in enumerate(zip(weights, biases)):
        h = h @ w.T + b                               # PyTorch Linear semantics
        if i < NUM_LAYERS - 1:
            h = jnp.maximum(h, 0.0)
    return h.reshape(b_, s_, h_)


if __name__ == "__main__":
    key = jax.random.PRNGKey(0)
    weights, biases, key = _init_params(key)

    # Primary case: batch=2, seq=8, hidden=32 (single-tile grid).
    kx, key = jax.random.split(key)
    x = jax.random.normal(kx, (2, 8, HIDDEN), dtype=jnp.float32)
    out = jax.block_until_ready(hybrid_model_forward(x, weights, biases))
    ref = _reference_forward(x, weights, biases)
    assert out.shape == ref.shape == (2, 8, HIDDEN)
    assert jnp.allclose(out, ref, atol=1e-4, rtol=1e-4)

    # Secondary case: enough rows for a multi-step grid plus a 128-row tail
    # pad, exercising the tiling / un-pad path.
    kx2, key = jax.random.split(key)
    x2 = jax.random.normal(kx2, (2, 2101, HIDDEN), dtype=jnp.float32)
    out2 = jax.block_until_ready(hybrid_model_forward(x2, weights, biases))
    ref2 = _reference_forward(x2, weights, biases)
    assert jnp.allclose(out2, ref2, atol=1e-4, rtol=1e-4)

    print("KERNEL_OK")
</pallas_src>

<mosaic_0001>
module attributes {stable_mosaic.version = 11 : i64} {
  func.func @_mlp_kernel(%arg0: i32, %arg1: memref<128x32xf32, #tpu.memory_space<vmem>>, %arg2: memref<3x32x32xf32, #tpu.memory_space<vmem>>, %arg3: memref<3x32x1xf32, #tpu.memory_space<vmem>>, %arg4: memref<32x32xf32, #tpu.memory_space<vmem>>, %arg5: memref<1x32xf32, #tpu.memory_space<vmem>>, %arg6: memref<128x32xf32, #tpu.memory_space<vmem>>) attributes {dimension_semantics = [#tpu.dimension_semantics<parallel>], iteration_bounds = array<i64: 1>, scalar_prefetch = 0 : i64, scratch_operands = 0 : i64, tpu.core_type = #tpu.core_type<tc>, window_params = [{transform_indices = @transform_0, window_bounds = array<i64: 128, 32>}, {pipeline_mode = #tpu.pipeline_mode<synchronous>, transform_indices = @transform_1, window_bounds = array<i64: 3, 32, 32>}, {pipeline_mode = #tpu.pipeline_mode<synchronous>, transform_indices = @transform_2, window_bounds = array<i64: 3, 32, 1>}, {pipeline_mode = #tpu.pipeline_mode<synchronous>, transform_indices = @transform_3, window_bounds = array<i64: 32, 32>}, {pipeline_mode = #tpu.pipeline_mode<synchronous>, transform_indices = @transform_4, window_bounds = array<i64: 1, 32>}, {transform_indices = @transform_5, window_bounds = array<i64: 128, 32>}]} {
    %c0 = arith.constant 0 : index
    %c0_0 = arith.constant 0 : index
    %c0_1 = arith.constant 0 : index
    %0 = vector.load %arg2[%c0, %c0_0, %c0_1] : memref<3x32x32xf32, #tpu.memory_space<vmem>>, vector<1x32x32xf32>
    %1 = vector.shape_cast %0 : vector<1x32x32xf32> to vector<32x32xf32>
    %c0_2 = arith.constant 0 : index
    %c0_3 = arith.constant 0 : index
    %2 = vector.load %arg1[%c0_2, %c0_3] : memref<128x32xf32, #tpu.memory_space<vmem>>, vector<128x32xf32>
    %cst = arith.constant dense<0.000000e+00> : vector<32x128xf32>
    %3 = tpu.matmul %1, %2, %cst {dimension_numbers = #tpu.dot_dimension_numbers<[1], [1], [0], [0], [0, 0, 1, 0], [], []>} : vector<32x32xf32>, vector<128x32xf32>, vector<32x128xf32> -> vector<32x128xf32>
    %c0_4 = arith.constant 0 : index
    %c0_5 = arith.constant 0 : index
    %c0_6 = arith.constant 0 : index
    %4 = vector.load %arg3[%c0_4, %c0_5, %c0_6] : memref<3x32x1xf32, #tpu.memory_space<vmem>>, vector<1x32x1xf32>
    %5 = vector.shape_cast %4 : vector<1x32x1xf32> to vector<32x1xf32>
    %6 = vector.broadcast %5 : vector<32x1xf32> to vector<32x128xf32>
    %7 = arith.addf %3, %6 : vector<32x128xf32>
    %cst_7 = arith.constant 0.000000e+00 : f32
    %8 = vector.broadcast %cst_7 : f32 to vector<32x128xf32>
    %9 = arith.maximumf %7, %8 : vector<32x128xf32>
    %c1 = arith.constant 1 : index
    %c0_8 = arith.constant 0 : index
    %c0_9 = arith.constant 0 : index
    %10 = vector.load %arg2[%c1, %c0_8, %c0_9] : memref<3x32x32xf32, #tpu.memory_space<vmem>>, vector<1x32x32xf32>
    %11 = vector.shape_cast %10 : vector<1x32x32xf32> to vector<32x32xf32>
    %cst_10 = arith.constant dense<0.000000e+00> : vector<32x128xf32>
    %12 = tpu.matmul %11, %9, %cst_10 {dimension_numbers = #tpu.dot_dimension_numbers<[1], [0], [0], [1], [0, 0, 1, 1], [], []>} : vector<32x32xf32>, vector<32x128xf32>, vector<32x128xf32> -> vector<32x128xf32>
    %c1_11 = arith.constant 1 : index
    %c0_12 = arith.constant 0 : index
    %c0_13 = arith.constant 0 : index
    %13 = vector.load %arg3[%c1_11, %c0_12, %c0_13] : memref<3x32x1xf32, #tpu.memory_space<vmem>>, vector<1x32x1xf32>
    %14 = vector.shape_cast %13 : vector<1x32x1xf32> to vector<32x1xf32>
    %15 = vector.broadcast %14 : vector<32x1xf32> to vector<32x128xf32>
    %16 = arith.addf %12, %15 : vector<32x128xf32>
    %cst_14 = arith.constant 0.000000e+00 : f32
    %17 = vector.broadcast %cst_14 : f32 to vector<32x128xf32>
    %18 = arith.maximumf %16, %17 : vector<32x128xf32>
    %c2 = arith.constant 2 : index
    %c0_15 = arith.constant 0 : index
    %c0_16 = arith.constant 0 : index
    %19 = vector.load %arg2[%c2, %c0_15, %c0_16] : memref<3x32x32xf32, #tpu.memory_space<vmem>>, vector<1x32x32xf32>
    %20 = vector.shape_cast %19 : vector<1x32x32xf32> to vector<32x32xf32>
    %cst_17 = arith.constant dense<0.000000e+00> : vector<32x128xf32>
    %21 = tpu.matmul %20, %18, %cst_17 {dimension_numbers = #tpu.dot_dimension_numbers<[1], [0], [0], [1], [0, 0, 1, 1], [], []>} : vector<32x32xf32>, vector<32x128xf32>, vector<32x128xf32> -> vector<32x128xf32>
    %c2_18 = arith.constant 2 : index
    %c0_19 = arith.constant 0 : index
    %c0_20 = arith.constant 0 : index
    %22 = vector.load %arg3[%c2_18, %c0_19, %c0_20] : memref<3x32x1xf32, #tpu.memory_space<vmem>>, vector<1x32x1xf32>
    %23 = vector.shape_cast %22 : vector<1x32x1xf32> to vector<32x1xf32>
    %24 = vector.broadcast %23 : vector<32x1xf32> to vector<32x128xf32>
    %25 = arith.addf %21, %24 : vector<32x128xf32>
    %cst_21 = arith.constant 0.000000e+00 : f32
    %26 = vector.broadcast %cst_21 : f32 to vector<32x128xf32>
    %27 = arith.maximumf %25, %26 : vector<32x128xf32>
    %c0_22 = arith.constant 0 : index
    %c0_23 = arith.constant 0 : index
    %28 = vector.load %arg4[%c0_22, %c0_23] : memref<32x32xf32, #tpu.memory_space<vmem>>, vector<32x32xf32>
    %cst_24 = arith.constant dense<0.000000e+00> : vector<128x32xf32>
    %29 = tpu.matmul %27, %28, %cst_24 {dimension_numbers = #tpu.dot_dimension_numbers<[0], [0], [1], [1], [0, 1, 1, 1], [], []>} : vector<32x128xf32>, vector<32x32xf32>, vector<128x32xf32> -> vector<128x32xf32>
    %c0_25 = arith.constant 0 : index
    %c0_26 = arith.constant 0 : index
    %30 = vector.load %arg5[%c0_25, %c0_26] : memref<1x32xf32, #tpu.memory_space<vmem>>, vector<1x32xf32>
    %31 = vector.broadcast %30 : vector<1x32xf32> to vector<128x32xf32>
    %32 = arith.addf %29, %31 : vector<128x32xf32>
    %c0_27 = arith.constant 0 : index
    %c0_28 = arith.constant 0 : index
    %33 = vector.load %arg6[%c0_27, %c0_28] : memref<128x32xf32, #tpu.memory_space<vmem>>, vector<128x32xf32>
    tpu.vector_store %arg6[%c0_27, %c0_28], %32 {strides = array<i32>} : memref<128x32xf32, #tpu.memory_space<vmem>>, vector<128x32xf32>,
    return
  }
  func.func @transform_0(%arg0: i32) -> (i32, i32) {
    %c0_i32 = arith.constant 0 : i32
    %c0_i32_0 = arith.constant 0 : i32
    return %arg0, %c0_i32 : i32, i32
  }
  func.func @transform_1(%arg0: i32) -> (i32, i32, i32) {
    %c0_i32 = arith.constant 0 : i32
    %c0_i32_0 = arith.constant 0 : i32
    %c0_i32_1 = arith.constant 0 : i32
    %c0_i32_2 = arith.constant 0 : i32
    return %c0_i32, %c0_i32_0, %c0_i32_1 : i32, i32, i32
  }
  func.func @transform_2(%arg0: i32) -> (i32, i32, i32) {
    %c0_i32 = arith.constant 0 : i32
    %c0_i32_0 = arith.constant 0 : i32
    %c0_i32_1 = arith.constant 0 : i32
    %c0_i32_2 = arith.constant 0 : i32
    return %c0_i32, %c0_i32_0, %c0_i32_1 : i32, i32, i32
  }
  func.func @transform_3(%arg0: i32) -> (i32, i32) {
    %c0_i32 = arith.constant 0 : i32
    %c0_i32_0 = arith.constant 0 : i32
    %c0_i32_1 = arith.constant 0 : i32
    return %c0_i32, %c0_i32_0 : i32, i32
  }
  func.func @transform_4(%arg0: i32) -> (i32, i32) {
    %c0_i32 = arith.constant 0 : i32
    %c0_i32_0 = arith.constant 0 : i32
    %c0_i32_1 = arith.constant 0 : i32
    return %c0_i32, %c0_i32_0 : i32, i32
  }
  func.func @transform_5(%arg0: i32) -> (i32, i32) {
    %c0_i32 = arith.constant 0 : i32
    %c0_i32_0 = arith.constant 0 : i32
    return %arg0, %c0_i32 : i32, i32
  }
}

</mosaic_0001>

<llo_original>
// kernel: tpu_custom_call.1
$region0: #{tpu_custom_call.1}
  #allocation0 [shape = 'u32[]', space=smem, size = 0x4, offset = 0x4, fixed_abs, tag = 'smem constant byte address 0x4 - core index']
  #allocation1 [shape = 'u32[72,128]{1,0:T(1,128)}', space=vmem, size = 0x9000, scoped, tag = 'internal scratch']
  %s0 = inlined_call_operand.vmem [shape: f32[128,32], index: 0, kind: input, shape index: {}]
  %s1 = inlined_call_operand.vmem [shape: f32[3,32,32], index: 1, kind: input, shape index: {}]
  %s2 = inlined_call_operand.vmem [shape: f32[3,32,1], index: 2, kind: input, shape index: {}]
  %s3 = inlined_call_operand.vmem [shape: f32[32,32], index: 3, kind: input, shape index: {}]
  %s4 = inlined_call_operand.vmem [shape: f32[1,32], index: 4, kind: input, shape index: {}]
  %s5 = inlined_call_operand.vmem [shape: f32[128,32], index: 5, kind: output, shape index: {}]
  %s6 = sld [smem:[#allocation0]]
  $region30: #{tpu_custom_call.1} parent=0
    _
  %s8 = ssub.s32 1, %s6
  %s9 = scalar_select 0, %s8, %s6
  // Predicated region
  $region2: #{tpu_custom_call.1} parent=0 // pred_check
    _
  $region3: #{tpu_custom_call.1} parent=0 // pred_check_branch
    %11 = sbr.rel (0) target = $region5
  $region4: #{tpu_custom_call.1} parent=0 // pred_region
    _
  $region5: #{tpu_custom_call.1} parent=0 // pred_fallthru
    _
  // Predicated region
  $region6: #{tpu_custom_call.1} parent=0 // pred_check
    _
  $region7: #{tpu_custom_call.1} parent=0 // pred_check_branch
    %13 = sbr.rel (0) target = $region9
  $region8: #{tpu_custom_call.1} parent=0 // pred_region
    _
  $region9: #{tpu_custom_call.1} parent=0 // pred_fallthru
    _
  // Predicated region
  $region10: #{tpu_custom_call.1} parent=0 // pred_check
    _
  $region11: #{tpu_custom_call.1} parent=0 // pred_check_branch
    %15 = sbr.rel (0) target = $region13
  $region12: #{tpu_custom_call.1} parent=0 // pred_region
    _
  $region13: #{tpu_custom_call.1} parent=0 // pred_fallthru
    _
  // Predicated region
  $region14: #{tpu_custom_call.1} parent=0 // pred_check
    _
  $region15: #{tpu_custom_call.1} parent=0 // pred_check_branch
    %17 = sbr.rel (0) target = $region17
  $region16: #{tpu_custom_call.1} parent=0 // pred_region
    _
  $region17: #{tpu_custom_call.1} parent=0 // pred_fallthru
    _
  // Predicated region
  $region18: #{tpu_custom_call.1} parent=0 // pred_check
    _
  $region19: #{tpu_custom_call.1} parent=0 // pred_check_branch
    %19 = sbr.rel (0) target = $region21
  $region20: #{tpu_custom_call.1} parent=0 // pred_region
    _
  $region21: #{tpu_custom_call.1} parent=0 // pred_fallthru
    _
  %v20 = vld [vmem:[%s1] sm:$0xff]
  %v21 = vld [vmem:[%s1 + $0x8] sm:$0xff]
  %v22 = vld [vmem:[%s1 + $0x10] sm:$0xff]
  %v23 = vld [vmem:[%s1 + $0x18] sm:$0xff]
  %v24 = vld [vmem:[%s0] sm:$0xff]
  %v25 = vld [vmem:[%s0 + $0x8] sm:$0xff]
  %v26 = vld [vmem:[%s0 + $0x10] sm:$0xff]
  %v27 = vld [vmem:[%s0 + $0x18] sm:$0xff]
  %v28 = vld [vmem:[%s0 + $0x20] sm:$0xff]
  %v29 = vld [vmem:[%s0 + $0x28] sm:$0xff]
  %v30 = vld [vmem:[%s0 + $0x30] sm:$0xff]
  %v31 = vld [vmem:[%s0 + $0x38] sm:$0xff]
  %v32 = vld [vmem:[%s0 + $0x40] sm:$0xff]
  %v33 = vld [vmem:[%s0 + $0x48] sm:$0xff]
  %v34 = vld [vmem:[%s0 + $0x50] sm:$0xff]
  %v35 = vld [vmem:[%s0 + $0x58] sm:$0xff]
  %v36 = vld [vmem:[%s0 + $0x60] sm:$0xff]
  %v37 = vld [vmem:[%s0 + $0x68] sm:$0xff]
  %v38 = vld [vmem:[%s0 + $0x70] sm:$0xff]
  %v39 = vld [vmem:[%s0 + $0x78] sm:$0xff]
  %v40 = vld [vmem:[%s2] sm:$0xff]
  %v41 = vld [vmem:[%s2 + $0x8] sm:$0xff]
  %v42 = vld [vmem:[%s2 + $0x10] sm:$0xff]
  %v43 = vld [vmem:[%s2 + $0x18] sm:$0xff]
  %45 = vset.pattern.permute.xlu0 0
  %46 = vperm.xlu0 %45, %v40
  %v47 = vpop.permute.xlu0 %46
  %50 = vset.pattern.permute.xlu0 0
  %51 = vperm.xlu0 %50, %v41
  %v52 = vpop.permute.xlu0 %51
  %55 = vset.pattern.permute.xlu0 0
  %56 = vperm.xlu0 %55, %v42
  %v57 = vpop.permute.xlu0 %56
  %60 = vset.pattern.permute.xlu0 0
  %61 = vperm.xlu0 %60, %v43
  %v62 = vpop.permute.xlu0 %61
  %vm64 = vcmask 261120
  %v66 = vsel %vm64, %v20, 0
  %v69 = vsel %vm64, %v21, 0
  %v72 = vsel %vm64, %v22, 0
  %v75 = vsel %vm64, %v23, 0
  %v78 = vsel %vm64, %v24, 0
  %v81 = vsel %vm64, %v25, 0
  %v84 = vsel %vm64, %v26, 0
  %v87 = vsel %vm64, %v27, 0
  %v90 = vsel %vm64, %v28, 0
  %v93 = vsel %vm64, %v29, 0
  %v96 = vsel %vm64, %v30, 0
  %v99 = vsel %vm64, %v31, 0
  %v102 = vsel %vm64, %v32, 0
  %v105 = vsel %vm64, %v33, 0
  %v108 = vsel %vm64, %v34, 0
  %v111 = vsel %vm64, %v35, 0
  %v114 = vsel %vm64, %v36, 0
  %v117 = vsel %vm64, %v37, 0
  %v120 = vsel %vm64, %v38, 0
  %v123 = vsel %vm64, %v39, 0
  %125 = vmatpush.xpose.msra.mxu0 %v123
  %126 = vmatpush.xpose.msra.mxu0 %v120
  %127 = vmatpush.xpose.msra.mxu0 %v117
  %128 = vmatpush.xpose.msra.mxu0 %v114
  %129 = vmatpush.xpose.msra.mxu0 %v111
  %130 = vmatpush.xpose.msra.mxu0 %v108
  %131 = vmatpush.xpose.msra.mxu0 %v105
  %132 = vmatpush.xpose.msra.mxu0 %v102
  %133 = vmatpush.xpose.msra.mxu0 %v99
  %134 = vmatpush.xpose.msra.mxu0 %v96
  %135 = vmatpush.xpose.msra.mxu0 %v93
  %136 = vmatpush.xpose.msra.mxu0 %v90
  %137 = vmatpush.xpose.msra.mxu0 %v87
  %138 = vmatpush.xpose.msra.mxu0 %v84
  %139 = vmatpush.xpose.msra.mxu0 %v81
  %140 = vmatpush.xpose.msra.mxu0 %v78
  %141 = vmatmul.f32.gmra.mxu0 %v66
  %v142 = vpop.f32.mrf.mxu0
  %v143 = vadd.f32 %v47, %v142
  %144 = vmatmul.f32.gmra.mxu0 %v69
  %v145 = vpop.f32.mrf.mxu0
  %v146 = vadd.f32 %v52, %v145
  %147 = vmatmul.f32.gmra.mxu0 %v72
  %v148 = vpop.f32.mrf.mxu0
  %v149 = vadd.f32 %v57, %v148
  %150 = vmatmul.f32.gmra.mxu0 %v75
  %v151 = vpop.f32.mrf.mxu0
  %v152 = vadd.f32 %v62, %v151
  %153 = vdwg.mxu0
  %v154 = vmax.f32 %v143, 0.0
  %v155 = vmax.f32 %v146, 0.0
  %v156 = vmax.f32 %v149, 0.0
  %v157 = vmax.f32 %v152, 0.0
  %s158 = scalar_lea.vmem %s1, 32
  %v159 = vld [vmem:[%s158] sm:$0xff]
  %v160 = vld [vmem:[%s158 + $0x8] sm:$0xff]
  %v161 = vld [vmem:[%s158 + $0x10] sm:$0xff]
  %v162 = vld [vmem:[%s158 + $0x18] sm:$0xff]
  %s163 = scalar_lea.vmem %s2, 32
  %v164 = vld [vmem:[%s163] sm:$0xff]
  %v165 = vld [vmem:[%s163 + $0x8] sm:$0xff]
  %v166 = vld [vmem:[%s163 + $0x10] sm:$0xff]
  %v167 = vld [vmem:[%s163 + $0x18] sm:$0xff]
  %169 = vset.pattern.permute.xlu0 0
  %170 = vperm.xlu0 %169, %v164
  %v171 = vpop.permute.xlu0 %170
  %174 = vset.pattern.permute.xlu0 0
  %175 = vperm.xlu0 %174, %v165
  %v176 = vpop.permute.xlu0 %175
  %179 = vset.pattern.permute.xlu0 0
  %180 = vperm.xlu0 %179, %v166
  %v181 = vpop.permute.xlu0 %180
  %184 = vset.pattern.permute.xlu0 0
  %185 = vperm.xlu0 %184, %v167
  %v186 = vpop.permute.xlu0 %185
  %v189 = vsel %vm64, %v159, 0
  %v192 = vsel %vm64, %v160, 0
  %v195 = vsel %vm64, %v161, 0
  %v198 = vsel %vm64, %v162, 0
  %200 = vmatpush.msra.mxu0 0.0
  %201 = vmatpush.msra.mxu0 0.0
  %202 = vmatpush.msra.mxu0 0.0
  %203 = vmatpush.msra.mxu0 0.0
  %204 = vmatpush.msra.mxu0 0.0
  %205 = vmatpush.msra.mxu0 0.0
  %206 = vmatpush.msra.mxu0 0.0
  %207 = vmatpush.msra.mxu0 0.0
  %208 = vmatpush.msra.mxu0 0.0
  %209 = vmatpush.msra.mxu0 0.0
  %210 = vmatpush.msra.mxu0 0.0
  %211 = vmatpush.msra.mxu0 0.0
  %212 = vmatpush.msra.mxu0 %v157
  %213 = vmatpush.msra.mxu0 %v156
  %214 = vmatpush.msra.mxu0 %v155
  %215 = vmatpush.msra.mxu0 %v154
  %216 = vmatmul.f32.gmra.mxu0 %v189
  %v217 = vpop.f32.mrf.mxu0
  %v218 = vadd.f32 %v171, %v217
  %219 = vmatmul.f32.gmra.mxu0 %v192
  %v220 = vpop.f32.mrf.mxu0
  %v221 = vadd.f32 %v176, %v220
  %222 = vmatmul.f32.gmra.mxu0 %v195
  %v223 = vpop.f32.mrf.mxu0
  %v224 = vadd.f32 %v181, %v223
  %225 = vmatmul.f32.gmra.mxu0 %v198
  %v226 = vpop.f32.mrf.mxu0
  %v227 = vadd.f32 %v186, %v226
  %228 = vdwg.mxu0
  %v229 = vmax.f32 %v218, 0.0
  %v230 = vmax.f32 %v221, 0.0
  %v231 = vmax.f32 %v224, 0.0
  %v232 = vmax.f32 %v227, 0.0
  %s233 = scalar_lea.vmem %s1, 64
  %v234 = vld [vmem:[%s233] sm:$0xff]
  %v235 = vld [vmem:[%s233 + $0x8] sm:$0xff]
  %v236 = vld [vmem:[%s233 + $0x10] sm:$0xff]
  %v237 = vld [vmem:[%s233 + $0x18] sm:$0xff]
  %s238 = scalar_lea.vmem %s2, 64
  %v239 = vld [vmem:[%s238] sm:$0xff]
  %v240 = vld [vmem:[%s238 + $0x8] sm:$0xff]
  %v241 = vld [vmem:[%s238 + $0x10] sm:$0xff]
  %v242 = vld [vmem:[%s238 + $0x18] sm:$0xff]
  %244 = vset.pattern.permute.xlu0 0
  %245 = vperm.xlu0 %244, %v239
  %v246 = vpop.permute.xlu0 %245
  %249 = vset.pattern.permute.xlu0 0
  %250 = vperm.xlu0 %249, %v240
  %v251 = vpop.permute.xlu0 %250
  %254 = vset.pattern.permute.xlu0 0
  %255 = vperm.xlu0 %254, %v241
  %v256 = vpop.permute.xlu0 %255
  %259 = vset.pattern.permute.xlu0 0
  %260 = vperm.xlu0 %259, %v242
  %v261 = vpop.permute.xlu0 %260
  %v264 = vsel %vm64, %v234, 0
  %v267 = vsel %vm64, %v235, 0
  %v270 = vsel %vm64, %v236, 0
  %v273 = vsel %vm64, %v237, 0
  %275 = vmatpush.msra.mxu0 0.0
  %276 = vmatpush.msra.mxu0 0.0
  %277 = vmatpush.msra.mxu0 0.0
  %278 = vmatpush.msra.mxu0 0.0
  %279 = vmatpush.msra.mxu0 0.0
  %280 = vmatpush.msra.mxu0 0.0
  %281 = vmatpush.msra.mxu0 0.0
  %282 = vmatpush.msra.mxu0 0.0
  %283 = vmatpush.msra.mxu0 0.0
  %284 = vmatpush.msra.mxu0 0.0
  %285 = vmatpush.msra.mxu0 0.0
  %286 = vmatpush.msra.mxu0 0.0
  %287 = vmatpush.msra.mxu0 %v232
  %288 = vmatpush.msra.mxu0 %v231
  %289 = vmatpush.msra.mxu0 %v230
  %290 = vmatpush.msra.mxu0 %v229
  %291 = vmatmul.f32.gmra.mxu0 %v264
  %v292 = vpop.f32.mrf.mxu0
  %v293 = vadd.f32 %v246, %v292
  %294 = vmatmul.f32.gmra.mxu0 %v267
  %v295 = vpop.f32.mrf.mxu0
  %v296 = vadd.f32 %v251, %v295
  %297 = vmatmul.f32.gmra.mxu0 %v270
  %v298 = vpop.f32.mrf.mxu0
  %v299 = vadd.f32 %v256, %v298
  %300 = vmatmul.f32.gmra.mxu0 %v273
  %v301 = vpop.f32.mrf.mxu0
  %v302 = vadd.f32 %v261, %v301
  %303 = vdwg.mxu0
  %v304 = vmax.f32 %v293, 0.0
  %v305 = vmax.f32 %v296, 0.0
  %v306 = vmax.f32 %v299, 0.0
  %v307 = vmax.f32 %v302, 0.0
  %v308 = vld [vmem:[%s3] sm:$0xff]
  %v309 = vld [vmem:[%s3 + $0x8] sm:$0xff]
  %v310 = vld [vmem:[%s3 + $0x10] sm:$0xff]
  %v311 = vld [vmem:[%s3 + $0x18] sm:$0xff]
  %v312 = vld [vmem:[%s4] sm:$0x1]
  %v314 = vperm.slane %v312, 0
  %316 = vxpose.xlu0.b32.start [1/16] %v304, 128
  %317 = vxpose.xlu0.b32.cont [2/16] %v305, 128
  %318 = vxpose.xlu0.b32.cont [3/16] %v306, 128
  %319 = vxpose.xlu0.b32.cont [4/16] %v307, 128
  %320 = vxpose.xlu0.b32.cont [5/16] 0.0, 128
  %321 = vxpose.xlu0.b32.cont [6/16] 0.0, 128
  %322 = vxpose.xlu0.b32.cont [7/16] 0.0, 128
  %323 = vxpose.xlu0.b32.cont [8/16] 0.0, 128
  %324 = vxpose.xlu0.b32.cont [9/16] 0.0, 128
  %325 = vxpose.xlu0.b32.cont [10/16] 0.0, 128
  %326 = vxpose.xlu0.b32.cont [11/16] 0.0, 128
  %327 = vxpose.xlu0.b32.cont [12/16] 0.0, 128
  %328 = vxpose.xlu0.b32.cont [13/16] 0.0, 128
  %329 = vxpose.xlu0.b32.cont [14/16] 0.0, 128
  %330 = vxpose.xlu0.b32.cont [15/16] 0.0, 128
  %331 = vxpose.xlu0.b32.end [16/16] 0.0, 128
  %v332 = vpop.trf.xlu0
  %v333 = vpop.trf.xlu0
  %v334 = vpop.trf.xlu0
  %v335 = vpop.trf.xlu0
  %v336 = vpop.trf.xlu0
  %v337 = vpop.trf.xlu0
  %v338 = vpop.trf.xlu0
  %v339 = vpop.trf.xlu0
  %v340 = vpop.trf.xlu0
  %v341 = vpop.trf.xlu0
  %v342 = vpop.trf.xlu0
  %v343 = vpop.trf.xlu0
  %v344 = vpop.trf.xlu0
  %v345 = vpop.trf.xlu0
  %v346 = vpop.trf.xlu0
  %v347 = vpop.trf.xlu0
  %v349 = vsel %vm64, %v332, 0
  %v352 = vsel %vm64, %v333, 0
  %v355 = vsel %vm64, %v334, 0
  %v358 = vsel %vm64, %v335, 0
  %v361 = vsel %vm64, %v336, 0
  %v364 = vsel %vm64, %v337, 0
  %v367 = vsel %vm64, %v338, 0
  %v370 = vsel %vm64, %v339, 0
  %v373 = vsel %vm64, %v340, 0
  %v376 = vsel %vm64, %v341, 0
  %v379 = vsel %vm64, %v342, 0
  %v382 = vsel %vm64, %v343, 0
  %v385 = vsel %vm64, %v344, 0
  %v388 = vsel %vm64, %v345, 0
  %v391 = vsel %vm64, %v346, 0
  %v394 = vsel %vm64, %v347, 0
  %396 = vmatpush.msra.mxu0 0.0
  %397 = vmatpush.msra.mxu0 0.0
  %398 = vmatpush.msra.mxu0 0.0
  %399 = vmatpush.msra.mxu0 0.0
  %400 = vmatpush.msra.mxu0 0.0
  %401 = vmatpush.msra.mxu0 0.0
  %402 = vmatpush.msra.mxu0 0.0
  %403 = vmatpush.msra.mxu0 0.0
  %404 = vmatpush.msra.mxu0 0.0
  %405 = vmatpush.msra.mxu0 0.0
  %406 = vmatpush.msra.mxu0 0.0
  %407 = vmatpush.msra.mxu0 0.0
  %408 = vmatpush.msra.mxu0 %v311
  %409 = vmatpush.msra.mxu0 %v310
  %410 = vmatpush.msra.mxu0 %v309
  %411 = vmatpush.msra.mxu0 %v308
  %412 = vmatmul.f32.gmra.mxu0 %v349
  %v413 = vpop.f32.mrf.mxu0
  %v414 = vadd.f32 %v314, %v413
  %415 = vmatmul.f32.gmra.mxu0 %v352
  %v416 = vpop.f32.mrf.mxu0
  %v417 = vadd.f32 %v314, %v416
  %418 = vmatmul.f32.gmra.mxu0 %v355
  %v419 = vpop.f32.mrf.mxu0
  %v420 = vadd.f32 %v314, %v419
  %421 = vmatmul.f32.gmra.mxu0 %v358
  %v422 = vpop.f32.mrf.mxu0
  %v423 = vadd.f32 %v314, %v422
  %424 = vmatmul.f32.gmra.mxu0 %v361
  %v425 = vpop.f32.mrf.mxu0
  %v426 = vadd.f32 %v314, %v425
  %427 = vmatmul.f32.gmra.mxu0 %v364
  %v428 = vpop.f32.mrf.mxu0
  %v429 = vadd.f32 %v314, %v428
  %430 = vmatmul.f32.gmra.mxu0 %v367
  %v431 = vpop.f32.mrf.mxu0
  %v432 = vadd.f32 %v314, %v431
  %433 = vmatmul.f32.gmra.mxu0 %v370
  %v434 = vpop.f32.mrf.mxu0
  %v435 = vadd.f32 %v314, %v434
  %436 = vmatmul.f32.gmra.mxu0 %v373
  %v437 = vpop.f32.mrf.mxu0
  %v438 = vadd.f32 %v314, %v437
  %439 = vmatmul.f32.gmra.mxu0 %v376
  %v440 = vpop.f32.mrf.mxu0
  %v441 = vadd.f32 %v314, %v440
  %442 = vmatmul.f32.gmra.mxu0 %v379
  %v443 = vpop.f32.mrf.mxu0
  %v444 = vadd.f32 %v314, %v443
  %445 = vmatmul.f32.gmra.mxu0 %v382
  %v446 = vpop.f32.mrf.mxu0
  %v447 = vadd.f32 %v314, %v446
  %448 = vmatmul.f32.gmra.mxu0 %v385
  %v449 = vpop.f32.mrf.mxu0
  %v450 = vadd.f32 %v314, %v449
  %451 = vmatmul.f32.gmra.mxu0 %v388
  %v452 = vpop.f32.mrf.mxu0
  %v453 = vadd.f32 %v314, %v452
  %454 = vmatmul.f32.gmra.mxu0 %v391
  %v455 = vpop.f32.mrf.mxu0
  %v456 = vadd.f32 %v314, %v455
  %457 = vmatmul.f32.gmra.mxu0 %v394
  %v458 = vpop.f32.mrf.mxu0
  %v459 = vadd.f32 %v314, %v458
  %460 = vdwg.mxu0
  %461 = vst.msk [vmem:[%s5] sm:$0xff] %vm64, %v414
  %462 = vst.msk [vmem:[%s5 + $0x8] sm:$0xff] %vm64, %v417
  %463 = vst.msk [vmem:[%s5 + $0x10] sm:$0xff] %vm64, %v420
  %464 = vst.msk [vmem:[%s5 + $0x18] sm:$0xff] %vm64, %v423
  %465 = vst.msk [vmem:[%s5 + $0x20] sm:$0xff] %vm64, %v426
  %466 = vst.msk [vmem:[%s5 + $0x28] sm:$0xff] %vm64, %v429
  %467 = vst.msk [vmem:[%s5 + $0x30] sm:$0xff] %vm64, %v432
  %468 = vst.msk [vmem:[%s5 + $0x38] sm:$0xff] %vm64, %v435
  %469 = vst.msk [vmem:[%s5 + $0x40] sm:$0xff] %vm64, %v438
  %470 = vst.msk [vmem:[%s5 + $0x48] sm:$0xff] %vm64, %v441
  %471 = vst.msk [vmem:[%s5 + $0x50] sm:$0xff] %vm64, %v444
  %472 = vst.msk [vmem:[%s5 + $0x58] sm:$0xff] %vm64, %v447
  %473 = vst.msk [vmem:[%s5 + $0x60] sm:$0xff] %vm64, %v450
  %474 = vst.msk [vmem:[%s5 + $0x68] sm:$0xff] %vm64, %v453
  %475 = vst.msk [vmem:[%s5 + $0x70] sm:$0xff] %vm64, %v456
  %476 = vst.msk [vmem:[%s5 + $0x78] sm:$0xff] %vm64, %v459
  // Predicated region
  $region22: #{tpu_custom_call.1} parent=0 // pred_check
    _
  $region23: #{tpu_custom_call.1} parent=0 // pred_check_branch
    %478 = sbr.rel (0) target = $region25
  $region24: #{tpu_custom_call.1} parent=0 // pred_region
    _
  $region25: #{tpu_custom_call.1} parent=0 // pred_fallthru
    _
  // Predicated region
  $region26: #{tpu_custom_call.1} parent=0 // pred_check
    _
  $region27: #{tpu_custom_call.1} parent=0 // pred_check_branch
    %480 = sbr.rel (0) target = $region29
  $region28: #{tpu_custom_call.1} parent=0 // pred_region
    _
  $region29: #{tpu_custom_call.1} parent=0 // pred_fallthru
    _

</llo_original>
